<compile_context>
chip_gen: v5e
topology: v5e:2x2
jax: 0.10.0
libtpu: 0.0.40
codegen_flags: <defaults>
</compile_context>

<pallas_src>
import functools

import jax
import jax.numpy as jnp
from jax.experimental import pallas as pl
from jax.experimental.pallas import tpu as pltpu


def rfaconv_kernel(p_ref, wlog_ref, msum_ref, w2_ref, bnsc_ref, bnsh_ref,
                   wf_ref, bias_ref, o_ref):
    p = p_ref[...]                                          # (CK2, TN) f32

    # --- get_weight: AvgPool + grouped 1x1 conv, folded into one matmul ----
    logits = jnp.dot(wlog_ref[...], p,
                     preferred_element_type=jnp.float32)    # (CK2, TN)

    # --- softmax over K2 within each channel block -------------------------
    # Subtracting the per-column (per-spatial-point) max is the same constant
    # for every channel, hence identical to per-channel max subtraction.
    m = jnp.max(logits, axis=0, keepdims=True)              # (1, TN)
    e = jnp.exp(logits - m)                                  # (CK2, TN)
    denom = jnp.dot(msum_ref[...], e,
                    preferred_element_type=jnp.float32)      # (CK2, TN)
    sm = e * pl.reciprocal(denom, approx=True)

    # --- generate_feature: grouped KxK conv + BN(eval) + ReLU --------------
    feat = jnp.dot(w2_ref[...], p,
                   preferred_element_type=jnp.float32)       # (CK2, TN)
    feat = jnp.maximum(feat * bnsc_ref[...] + bnsh_ref[...], 0.0)

    # --- weight features, fold final KxK/stride-K conv ---------------------
    wd = feat * sm                                           # (CK2, TN)
    o_ref[...] = (jnp.dot(wf_ref[...], wd,
                          preferred_element_type=jnp.float32)
                  + bias_ref[...])                           # (OC, TN)


def _extract_patches_t(x, k, stride):
    """x: (b, c, H, W) -> (c*k*k, b*h_out*w_out), zero padded by k//2."""
    b, c, H, W = x.shape
    pad = k // 2
    h_out = (H + 2 * pad - k) // stride + 1
    w_out = (W + 2 * pad - k) // stride + 1
    xp = jnp.pad(x, ((0, 0), (0, 0), (pad, pad), (pad, pad)))
    slices = []
    for dy in range(k):
        for dx in range(k):
            sl = xp[:, :,
                    dy:dy + stride * (h_out - 1) + 1:stride,
                    dx:dx + stride * (w_out - 1) + 1:stride]
            slices.append(sl)                                # (b, c, h, w)
    patches = jnp.stack(slices, axis=2)                      # (b, c, k2, h, w)
    patches = jnp.transpose(patches, (1, 2, 0, 3, 4))        # (c, k2, b, h, w)
    return patches.reshape(c * k * k, b * h_out * w_out), h_out, w_out


def _blockdiag(blocks):
    """blocks: (c, a, b) -> block-diagonal (c*a, c*b)."""
    c, a, b = blocks.shape
    eye = jnp.eye(c, dtype=blocks.dtype)
    out = jnp.einsum('cab,cd->cadb', blocks, eye)            # (c, a, c, b)
    return out.reshape(c * a, c * b)


def _pack_params(params, k2, oc):
    """Pack module params into flat/block-diagonal kernel matrices."""
    w1, w2t, bn_scale, bn_shift, wf, bias = params
    c = w1.shape[0]
    ck2 = c * k2
    # avg-pool (mean over K2) + grouped 1x1 conv, as one block-diag matmul:
    # block c entry [j, j'] = w1[c, j] / k2   (independent of j')
    wlog_blocks = jnp.broadcast_to((w1 / k2)[:, :, None], (c, k2, k2))
    wlog = _blockdiag(wlog_blocks)                           # (CK2, CK2)
    # per-channel softmax denominator (sum over K2 within channel block)
    msum = _blockdiag(jnp.ones((c, k2, k2), jnp.float32))    # (CK2, CK2)
    # grouped KxK conv: block c = w2[c, j_out, j_in]
    w2_blocks = jnp.transpose(w2t, (0, 2, 1))                # (c, k2_out, k2_in)
    w2bd = _blockdiag(w2_blocks)                             # (CK2, CK2)
    # BN (inference) scale/shift as column vectors
    bnsc = bn_scale.reshape(ck2, 1)
    bnsh = bn_shift.reshape(ck2, 1)
    # final conv: Wf2d[o, c*k2+j] = wf[c, j, o]
    wf2d = jnp.transpose(wf, (2, 0, 1)).reshape(oc, ck2)     # (OC, CK2)
    bias2 = bias.reshape(oc, 1)
    return wlog, msum, w2bd, bnsc, bnsh, wf2d, bias2


@functools.partial(jax.jit, static_argnames=("kernel_size", "stride", "tile_n"))
def rfaconv_forward(x, params, kernel_size, stride=1, tile_n=512):
    b, c, _, _ = x.shape
    k = kernel_size
    k2 = k * k
    ck2 = c * k2
    wf = params[4]
    oc = wf.shape[-1]

    patches, h_out, w_out = _extract_patches_t(x, k, stride)   # (CK2, N)
    n = patches.shape[1]
    n_pad = pl.cdiv(n, tile_n) * tile_n
    if n_pad != n:
        patches = jnp.pad(patches, ((0, 0), (0, n_pad - n)))

    wlog, msum, w2bd, bnsc, bnsh, wf2d, bias2 = _pack_params(params, k2, oc)

    grid = (n_pad // tile_n,)
    out = pl.pallas_call(
        rfaconv_kernel,
        out_shape=jax.ShapeDtypeStruct((oc, n_pad), jnp.float32),
        grid_spec=pltpu.PrefetchScalarGridSpec(
            num_scalar_prefetch=0,
            grid=grid,
            in_specs=[
                pl.BlockSpec((ck2, tile_n), lambda i: (0, i)),   # patches
                pl.BlockSpec((ck2, ck2), lambda i: (0, 0)),      # wlog
                pl.BlockSpec((ck2, ck2), lambda i: (0, 0)),      # msum
                pl.BlockSpec((ck2, ck2), lambda i: (0, 0)),      # w2bd
                pl.BlockSpec((ck2, 1), lambda i: (0, 0)),        # bn scale
                pl.BlockSpec((ck2, 1), lambda i: (0, 0)),        # bn shift
                pl.BlockSpec((oc, ck2), lambda i: (0, 0)),       # wf2d
                pl.BlockSpec((oc, 1), lambda i: (0, 0)),         # bias
            ],
            out_specs=pl.BlockSpec((oc, tile_n), lambda i: (0, i)),
        ),
        compiler_params=pltpu.CompilerParams(
            dimension_semantics=("parallel",)),
    )(patches, wlog, msum, w2bd, bnsc, bnsh, wf2d, bias2)

    out = out[:, :n].reshape(oc, b, h_out, w_out)
    return jnp.transpose(out, (1, 0, 2, 3))   # NCHW, matches PyTorch output


def init_params(key, in_channel, out_channel, kernel_size):
    """Deterministic synthetic parameters with the module's shapes."""
    k = kernel_size
    k2 = k * k
    keys = jax.random.split(key, 7)
    # get_weight 1x1 grouped conv:  (c*k2, 1, 1, 1)  ->  (c, k2)
    w1 = 0.1 * jax.random.normal(keys[0], (in_channel, k2), jnp.float32)
    # generate_feature grouped KxK conv: (c*k2, 1, k, k) -> (c, k2_out, k2_tap)
    w2 = 0.1 * jax.random.normal(keys[1], (in_channel, k2, k2), jnp.float32)
    w2t = jnp.transpose(w2, (0, 2, 1))          # (c, k2_tap, k2_out)
    # BatchNorm2d(c*k2), inference semantics
    gamma = 1.0 + 0.1 * jax.random.normal(keys[2], (in_channel, k2), jnp.float32)
    beta = 0.1 * jax.random.normal(keys[3], (in_channel, k2), jnp.float32)
    r_mean = 0.05 * jax.random.normal(keys[4], (in_channel, k2), jnp.float32)
    r_var = jnp.abs(1.0 + 0.1 * jax.random.normal(keys[5], (in_channel, k2),
                                                  jnp.float32))
    eps = 1e-5
    bn_scale = gamma / jnp.sqrt(r_var + eps)
    bn_shift = beta - r_mean * bn_scale
    # final conv: (oc, c, k, k) -> Wf[c, j, oc], plus bias (oc,)
    wc = 0.1 * jax.random.normal(keys[6], (out_channel, in_channel, k, k),
                                 jnp.float32)
    wf = jnp.transpose(wc.reshape(out_channel, in_channel, k2), (1, 2, 0))
    bias = 0.1 * jax.random.normal(jax.random.fold_in(key, 99),
                                   (out_channel,), jnp.float32)
    return (w1, w2t, bn_scale, bn_shift, wf, bias)


def rfaconv_reference(x, params, kernel_size, stride=1):
    """Pure-JAX reference (same math, no Pallas) for a correctness check."""
    k = kernel_size
    k2 = k * k
    w1, w2t, bn_scale, bn_shift, wf, bias = params
    b, c, _, _ = x.shape
    pt, h_out, w_out = _extract_patches_t(x, k, stride)        # (c*k2, N)
    patches = jnp.transpose(pt.reshape(c, k2, -1), (2, 0, 1))  # (N, c, k2)
    avg = jnp.mean(patches, axis=-1, keepdims=True)            # (N, c, 1)
    sm = jax.nn.softmax(avg * w1[None], axis=-1)
    feat = jnp.einsum("ncp,cpj->ncj", patches, w2t)
    feat = jnp.maximum(feat * bn_scale[None] + bn_shift[None], 0.0)
    wd = feat * sm
    out = jnp.einsum("ncj,cjo->no", wd, wf) + bias[None]
    out = out.reshape(b, h_out, w_out, -1)
    return jnp.transpose(out, (0, 3, 1, 2))


if __name__ == "__main__":
    in_channel, out_channel, kernel_size, stride = 4, 8, 3, 1
    batch, spatial = 2, 16

    key = jax.random.PRNGKey(0)
    kx, kp = jax.random.split(key)
    x = jax.random.normal(kx, (batch, in_channel, spatial, spatial),
                          jnp.float32)
    params = init_params(kp, in_channel, out_channel, kernel_size)

    # tile_n=256 -> grid of 2 steps at this small test size (512 points).
    out = rfaconv_forward(x, params, kernel_size, stride, tile_n=256)
    out = jax.block_until_ready(out)

    ref = rfaconv_reference(x, params, kernel_size, stride)
    assert out.shape == (batch, out_channel, spatial, spatial), out.shape
    # tolerance loosened slightly for the EUP approx reciprocal in softmax
    assert jnp.allclose(out, ref, rtol=2e-3, atol=2e-3), (
        float(jnp.max(jnp.abs(out - ref))))

    print("KERNEL_OK")
</pallas_src>

<mosaic_0001>
module attributes {stable_mosaic.version = 11 : i64} {
  func.func @rfaconv_kernel(%arg0: i32, %arg1: memref<36x256xf32, #tpu.memory_space<vmem>>, %arg2: memref<36x36xf32, #tpu.memory_space<vmem>>, %arg3: memref<36x36xf32, #tpu.memory_space<vmem>>, %arg4: memref<36x36xf32, #tpu.memory_space<vmem>>, %arg5: memref<36x1xf32, #tpu.memory_space<vmem>>, %arg6: memref<36x1xf32, #tpu.memory_space<vmem>>, %arg7: memref<8x36xf32, #tpu.memory_space<vmem>>, %arg8: memref<8x1xf32, #tpu.memory_space<vmem>>, %arg9: memref<8x256xf32, #tpu.memory_space<vmem>>) attributes {dimension_semantics = [#tpu.dimension_semantics<parallel>], iteration_bounds = array<i64: 2>, scalar_prefetch = 0 : i64, scratch_operands = 0 : i64, tpu.core_type = #tpu.core_type<tc>, window_params = [{transform_indices = @transform_0, window_bounds = array<i64: 36, 256>}, {pipeline_mode = #tpu.pipeline_mode<synchronous>, transform_indices = @transform_1, window_bounds = array<i64: 36, 36>}, {pipeline_mode = #tpu.pipeline_mode<synchronous>, transform_indices = @transform_2, window_bounds = array<i64: 36, 36>}, {pipeline_mode = #tpu.pipeline_mode<synchronous>, transform_indices = @transform_3, window_bounds = array<i64: 36, 36>}, {pipeline_mode = #tpu.pipeline_mode<synchronous>, transform_indices = @transform_4, window_bounds = array<i64: 36, 1>}, {pipeline_mode = #tpu.pipeline_mode<synchronous>, transform_indices = @transform_5, window_bounds = array<i64: 36, 1>}, {pipeline_mode = #tpu.pipeline_mode<synchronous>, transform_indices = @transform_6, window_bounds = array<i64: 8, 36>}, {pipeline_mode = #tpu.pipeline_mode<synchronous>, transform_indices = @transform_7, window_bounds = array<i64: 8, 1>}, {transform_indices = @transform_8, window_bounds = array<i64: 8, 256>}]} {
    %c0 = arith.constant 0 : index
    %c0_0 = arith.constant 0 : index
    %0 = vector.load %arg1[%c0, %c0_0] : memref<36x256xf32, #tpu.memory_space<vmem>>, vector<36x256xf32>
    %c0_1 = arith.constant 0 : index
    %c0_2 = arith.constant 0 : index
    %1 = vector.load %arg2[%c0_1, %c0_2] : memref<36x36xf32, #tpu.memory_space<vmem>>, vector<36x36xf32>
    %cst = arith.constant dense<0.000000e+00> : vector<36x256xf32>
    %2 = tpu.matmul %1, %0, %cst {dimension_numbers = #tpu.dot_dimension_numbers<[1], [0], [0], [1], [0, 0, 1, 1], [], []>} : vector<36x36xf32>, vector<36x256xf32>, vector<36x256xf32> -> vector<36x256xf32>
    %cst_3 = arith.constant dense<0xFF800000> : vector<256xf32>
    %3 = vector.multi_reduction <maximumf>, %2, %cst_3 [0] : vector<36x256xf32> to vector<256xf32>
    %4 = vector.shape_cast %3 : vector<256xf32> to vector<1x256xf32>
    %5 = vector.broadcast %4 : vector<1x256xf32> to vector<36x256xf32>
    %6 = arith.subf %2, %5 : vector<36x256xf32>
    %7 = math.exp %6 : vector<36x256xf32>
    %c0_4 = arith.constant 0 : index
    %c0_5 = arith.constant 0 : index
    %8 = vector.load %arg3[%c0_4, %c0_5] : memref<36x36xf32, #tpu.memory_space<vmem>>, vector<36x36xf32>
    %cst_6 = arith.constant dense<0.000000e+00> : vector<36x256xf32>
    %9 = tpu.matmul %8, %7, %cst_6 {dimension_numbers = #tpu.dot_dimension_numbers<[1], [0], [0], [1], [0, 0, 1, 1], [], []>} : vector<36x36xf32>, vector<36x256xf32>, vector<36x256xf32> -> vector<36x256xf32>
    %10 = tpu.reciprocal %9 {approx = true} : vector<36x256xf32> -> vector<36x256xf32>
    %11 = arith.mulf %7, %10 : vector<36x256xf32>
    %c0_7 = arith.constant 0 : index
    %c0_8 = arith.constant 0 : index
    %12 = vector.load %arg4[%c0_7, %c0_8] : memref<36x36xf32, #tpu.memory_space<vmem>>, vector<36x36xf32>
    %cst_9 = arith.constant dense<0.000000e+00> : vector<36x256xf32>
    %13 = tpu.matmul %12, %0, %cst_9 {dimension_numbers = #tpu.dot_dimension_numbers<[1], [0], [0], [1], [0, 0, 1, 1], [], []>} : vector<36x36xf32>, vector<36x256xf32>, vector<36x256xf32> -> vector<36x256xf32>
    %c0_10 = arith.constant 0 : index
    %c0_11 = arith.constant 0 : index
    %14 = vector.load %arg5[%c0_10, %c0_11] : memref<36x1xf32, #tpu.memory_space<vmem>>, vector<36x1xf32>
    %15 = vector.broadcast %14 : vector<36x1xf32> to vector<36x256xf32>
    %16 = arith.mulf %13, %15 : vector<36x256xf32>
    %c0_12 = arith.constant 0 : index
    %c0_13 = arith.constant 0 : index
    %17 = vector.load %arg6[%c0_12, %c0_13] : memref<36x1xf32, #tpu.memory_space<vmem>>, vector<36x1xf32>
    %18 = vector.broadcast %17 : vector<36x1xf32> to vector<36x256xf32>
    %19 = arith.addf %16, %18 : vector<36x256xf32>
    %cst_14 = arith.constant 0.000000e+00 : f32
    %20 = vector.broadcast %cst_14 : f32 to vector<36x256xf32>
    %21 = arith.maximumf %19, %20 : vector<36x256xf32>
    %22 = arith.mulf %21, %11 : vector<36x256xf32>
    %c0_15 = arith.constant 0 : index
    %c0_16 = arith.constant 0 : index
    %23 = vector.load %arg7[%c0_15, %c0_16] : memref<8x36xf32, #tpu.memory_space<vmem>>, vector<8x36xf32>
    %cst_17 = arith.constant dense<0.000000e+00> : vector<8x256xf32>
    %24 = tpu.matmul %23, %22, %cst_17 {dimension_numbers = #tpu.dot_dimension_numbers<[1], [0], [0], [1], [0, 0, 1, 1], [], []>} : vector<8x36xf32>, vector<36x256xf32>, vector<8x256xf32> -> vector<8x256xf32>
    %c0_18 = arith.constant 0 : index
    %c0_19 = arith.constant 0 : index
    %25 = vector.load %arg8[%c0_18, %c0_19] : memref<8x1xf32, #tpu.memory_space<vmem>>, vector<8x1xf32>
    %26 = vector.broadcast %25 : vector<8x1xf32> to vector<8x256xf32>
    %27 = arith.addf %24, %26 : vector<8x256xf32>
    %c0_20 = arith.constant 0 : index
    %c0_21 = arith.constant 0 : index
    %28 = vector.load %arg9[%c0_20, %c0_21] : memref<8x256xf32, #tpu.memory_space<vmem>>, vector<8x256xf32>
    tpu.vector_store %arg9[%c0_20, %c0_21], %27 {strides = array<i32>} : memref<8x256xf32, #tpu.memory_space<vmem>>, vector<8x256xf32>,
    return
  }
  func.func @transform_0(%arg0: i32) -> (i32, i32) {
    %c0_i32 = arith.constant 0 : i32
    %c0_i32_0 = arith.constant 0 : i32
    return %c0_i32, %arg0 : i32, i32
  }
  func.func @transform_1(%arg0: i32) -> (i32, i32) {
    %c0_i32 = arith.constant 0 : i32
    %c0_i32_0 = arith.constant 0 : i32
    %c0_i32_1 = arith.constant 0 : i32
    return %c0_i32, %c0_i32_0 : i32, i32
  }
  func.func @transform_2(%arg0: i32) -> (i32, i32) {
    %c0_i32 = arith.constant 0 : i32
    %c0_i32_0 = arith.constant 0 : i32
    %c0_i32_1 = arith.constant 0 : i32
    return %c0_i32, %c0_i32_0 : i32, i32
  }
  func.func @transform_3(%arg0: i32) -> (i32, i32) {
    %c0_i32 = arith.constant 0 : i32
    %c0_i32_0 = arith.constant 0 : i32
    %c0_i32_1 = arith.constant 0 : i32
    return %c0_i32, %c0_i32_0 : i32, i32
  }
  func.func @transform_4(%arg0: i32) -> (i32, i32) {
    %c0_i32 = arith.constant 0 : i32
    %c0_i32_0 = arith.constant 0 : i32
    %c0_i32_1 = arith.constant 0 : i32
    return %c0_i32, %c0_i32_0 : i32, i32
  }
  func.func @transform_5(%arg0: i32) -> (i32, i32) {
    %c0_i32 = arith.constant 0 : i32
    %c0_i32_0 = arith.constant 0 : i32
    %c0_i32_1 = arith.constant 0 : i32
    return %c0_i32, %c0_i32_0 : i32, i32
  }
  func.func @transform_6(%arg0: i32) -> (i32, i32) {
    %c0_i32 = arith.constant 0 : i32
    %c0_i32_0 = arith.constant 0 : i32
    %c0_i32_1 = arith.constant 0 : i32
    return %c0_i32, %c0_i32_0 : i32, i32
  }
  func.func @transform_7(%arg0: i32) -> (i32, i32) {
    %c0_i32 = arith.constant 0 : i32
    %c0_i32_0 = arith.constant 0 : i32
    %c0_i32_1 = arith.constant 0 : i32
    return %c0_i32, %c0_i32_0 : i32, i32
  }
  func.func @transform_8(%arg0: i32) -> (i32, i32) {
    %c0_i32 = arith.constant 0 : i32
    %c0_i32_0 = arith.constant 0 : i32
    return %c0_i32, %arg0 : i32, i32
  }
}

</mosaic_0001>

<llo_original>
// kernel: rfaconv_forward.1
$region0: #{rfaconv_forward.1}
  #allocation0 [shape = 'u32[]', space=smem, size = 0x4, offset = 0x4, fixed_abs, tag = 'smem constant byte address 0x4 - core index']
  #allocation1 [shape = 'u32[72,128]{1,0:T(1,128)}', space=vmem, size = 0x9000, scoped, tag = 'internal scratch']
  %s0 = inlined_call_operand.vmem [shape: f32[36,512], index: 0, kind: input, shape index: {}]
  %s1 = inlined_call_operand.vmem [shape: f32[36,36], index: 1, kind: input, shape index: {}]
  %s2 = inlined_call_operand.vmem [shape: f32[36,36], index: 2, kind: input, shape index: {}]
  %s3 = inlined_call_operand.vmem [shape: f32[36,36], index: 3, kind: input, shape index: {}]
  %s4 = inlined_call_operand.vmem [shape: f32[36,1], index: 4, kind: input, shape index: {}]
  %s5 = inlined_call_operand.vmem [shape: f32[36,1], index: 5, kind: input, shape index: {}]
  %s6 = inlined_call_operand.vmem [shape: f32[8,36], index: 6, kind: input, shape index: {}]
  %s7 = inlined_call_operand.vmem [shape: f32[8,1], index: 7, kind: input, shape index: {}]
  %s8 = inlined_call_operand.vmem [shape: f32[8,512], index: 8, kind: output, shape index: {}]
  %s9 = sld [smem:[#allocation0]]
  $region88: #{rfaconv_forward.1} parent=0
    _
  %s11 = ssub.s32 1, %s9
  %s12 = scalar_select 0, %s11, %s9
  $region1: #{rfaconv_forward.1} parent=0
    #allocation2 [shape = 'u8[81920]{0}', space=vmem, size = 0x14000, scoped, tag = 'input window, operand 0']
    loop: start=0, step=1, limit=4
    $region2: #{rfaconv_forward.1} parent=1 // loop_pre_header
      _
    $region3: #{rfaconv_forward.1} parent=1 // loop_header
      %s14 = sphi 0, %s18
      %p15 = scmp.ge.s32.totalorder %s14, 4
      %s24 = sphi 0, %s26
      %s27 = sphi 0, %s24
      %s28 = sphi 0, %s27
      %s44 = sphi 0, %s28
      %s48 = sphi 0, %s48
      %s50 = sphi 0, %s48
      %s51 = sphi 0, %s50
      %s65 = sphi 0, %s51
      %s69 = sphi 0, %s69
      %s71 = sphi 0, %s69
      %s72 = sphi 0, %s71
      %s86 = sphi 0, %s72
      %s90 = sphi 0, %s90
      %s92 = sphi 0, %s90
      %s93 = sphi 0, %s92
      %s107 = sphi 0, %s93
      %s111 = sphi 0, %s111
      %s113 = sphi 0, %s111
      %s114 = sphi 0, %s113
      %s128 = sphi 0, %s114
      %s132 = sphi 0, %s132
      %s134 = sphi 0, %s132
      %s135 = sphi 0, %s134
      %s149 = sphi 0, %s135
      %s153 = sphi 0, %s153
      %s155 = sphi 0, %s153
      %s156 = sphi 0, %s155
      %s170 = sphi 0, %s156
      %s174 = sphi 0, %s174
      %s176 = sphi 0, %s174
      %s177 = sphi 0, %s176
      %s191 = sphi 0, %s177
      %s197 = sphi 0, %s199
      %s200 = sphi 0, %s197
      %s201 = sphi 0, %s200
      %s217 = sphi 0, %s201
    $region4: #{rfaconv_forward.1} parent=1 // loop_header_branch
      %17 = sbr.rel (%p15) target = $region8
    $region5: #{rfaconv_forward.1} parent=1 // loop_body
      %s19 = ssub.s32 %s14, 1
      %s20 = ssub.s32 %s14, 2
      %s21 = sadd.s32 %s14, 1
      %s22 = ssub.s32 %s14, %s21
      %p23 = scmp.eq.s32.totalorder %s22, 0
      %s25 = sadd.s32 %s24, 1
      %s26 = scalar_select %p23, %s24, %s25
      %p29 = pneg %p23
      %p30 = scmp.eq.s32.totalorder %s14, 1
      %p31 = por %p29, %p30
      %p32 = scmp.ne.s32.totalorder %s24, %s27
      %p33 = scmp.eq.s32.totalorder %s14, 0
      %p34 = por %p32, %p33
      %p35 = scmp.ne.s32.totalorder %s24, %s27
      %p36 = scmp.eq.s32.totalorder %s19, 1
      %p37 = por %p35, %p36
      %p38 = scmp.ne.s32.totalorder %s27, %s28
      %p39 = scmp.eq.s32.totalorder %s19, 0
      %p40 = por %p38, %p39
      %p41 = scmp.ne.s32.totalorder %s27, %s28
      %p42 = scmp.eq.s32.totalorder %s20, 1
      %p43 = por %p41, %p42
      %p45 = scmp.ne.s32.totalorder %s28, %s44
      %p46 = scmp.eq.s32.totalorder %s20, 0
      %p47 = por %p45, %p46
      %s49 = sadd.s32 %s48, 1
      %p52 = scmp.eq.s32.totalorder %s14, 1
      %p53 = scmp.ne.s32.totalorder %s48, %s50
      %p54 = scmp.eq.s32.totalorder %s14, 0
      %p55 = por %p53, %p54
      %p56 = scmp.ne.s32.totalorder %s48, %s50
      %p57 = scmp.eq.s32.totalorder %s19, 1
      %p58 = por %p56, %p57
      %p59 = scmp.ne.s32.totalorder %s50, %s51
      %p60 = scmp.eq.s32.totalorder %s19, 0
      %p61 = por %p59, %p60
      %p62 = scmp.ne.s32.totalorder %s50, %s51
      %p63 = scmp.eq.s32.totalorder %s20, 1
      %p64 = por %p62, %p63
      %p66 = scmp.ne.s32.totalorder %s51, %s65
      %p67 = scmp.eq.s32.totalorder %s20, 0
      %p68 = por %p66, %p67
      %s70 = sadd.s32 %s69, 1
      %p73 = scmp.eq.s32.totalorder %s14, 1
      %p74 = scmp.ne.s32.totalorder %s69, %s71
      %p75 = scmp.eq.s32.totalorder %s14, 0
      %p76 = por %p74, %p75
      %p77 = scmp.ne.s32.totalorder %s69, %s71
      %p78 = scmp.eq.s32.totalorder %s19, 1
      %p79 = por %p77, %p78
      %p80 = scmp.ne.s32.totalorder %s71, %s72
      %p81 = scmp.eq.s32.totalorder %s19, 0
      %p82 = por %p80, %p81
      %p83 = scmp.ne.s32.totalorder %s71, %s72
      %p84 = scmp.eq.s32.totalorder %s20, 1
      %p85 = por %p83, %p84
      %p87 = scmp.ne.s32.totalorder %s72, %s86
      %p88 = scmp.eq.s32.totalorder %s20, 0
      %p89 = por %p87, %p88
      %s91 = sadd.s32 %s90, 1
      %p94 = scmp.eq.s32.totalorder %s14, 1
      %p95 = scmp.ne.s32.totalorder %s90, %s92
      %p96 = scmp.eq.s32.totalorder %s14, 0
      %p97 = por %p95, %p96
      %p98 = scmp.ne.s32.totalorder %s90, %s92
      %p99 = scmp.eq.s32.totalorder %s19, 1
      %p100 = por %p98, %p99
      %p101 = scmp.ne.s32.totalorder %s92, %s93
      %p102 = scmp.eq.s32.totalorder %s19, 0
      %p103 = por %p101, %p102
      %p104 = scmp.ne.s32.totalorder %s92, %s93
      %p105 = scmp.eq.s32.totalorder %s20, 1
      %p106 = por %p104, %p105
      %p108 = scmp.ne.s32.totalorder %s93, %s107
      %p109 = scmp.eq.s32.totalorder %s20, 0
      %p110 = por %p108, %p109
      %s112 = sadd.s32 %s111, 1
      %p115 = scmp.eq.s32.totalorder %s14, 1
      %p116 = scmp.ne.s32.totalorder %s111, %s113
      %p117 = scmp.eq.s32.totalorder %s14, 0
      %p118 = por %p116, %p117
      %p119 = scmp.ne.s32.totalorder %s111, %s113
      %p120 = scmp.eq.s32.totalorder %s19, 1
      %p121 = por %p119, %p120
      %p122 = scmp.ne.s32.totalorder %s113, %s114
      %p123 = scmp.eq.s32.totalorder %s19, 0
      %p124 = por %p122, %p123
      %p125 = scmp.ne.s32.totalorder %s113, %s114
      %p126 = scmp.eq.s32.totalorder %s20, 1
      %p127 = por %p125, %p126
      %p129 = scmp.ne.s32.totalorder %s114, %s128
      %p130 = scmp.eq.s32.totalorder %s20, 0
      %p131 = por %p129, %p130
      %s133 = sadd.s32 %s132, 1
      %p136 = scmp.eq.s32.totalorder %s14, 1
      %p137 = scmp.ne.s32.totalorder %s132, %s134
      %p138 = scmp.eq.s32.totalorder %s14, 0
      %p139 = por %p137, %p138
      %p140 = scmp.ne.s32.totalorder %s132, %s134
      %p141 = scmp.eq.s32.totalorder %s19, 1
      %p142 = por %p140, %p141
      %p143 = scmp.ne.s32.totalorder %s134, %s135
      %p144 = scmp.eq.s32.totalorder %s19, 0
      %p145 = por %p143, %p144
      %p146 = scmp.ne.s32.totalorder %s134, %s135
      %p147 = scmp.eq.s32.totalorder %s20, 1
      %p148 = por %p146, %p147
      %p150 = scmp.ne.s32.totalorder %s135, %s149
      %p151 = scmp.eq.s32.totalorder %s20, 0
      %p152 = por %p150, %p151
      %s154 = sadd.s32 %s153, 1
      %p157 = scmp.eq.s32.totalorder %s14, 1
      %p158 = scmp.ne.s32.totalorder %s153, %s155
      %p159 = scmp.eq.s32.totalorder %s14, 0
      %p160 = por %p158, %p159
      %p161 = scmp.ne.s32.totalorder %s153, %s155
      %p162 = scmp.eq.s32.totalorder %s19, 1
      %p163 = por %p161, %p162
      %p164 = scmp.ne.s32.totalorder %s155, %s156
      %p165 = scmp.eq.s32.totalorder %s19, 0
      %p166 = por %p164, %p165
      %p167 = scmp.ne.s32.totalorder %s155, %s156
      %p168 = scmp.eq.s32.totalorder %s20, 1
      %p169 = por %p167, %p168
      %p171 = scmp.ne.s32.totalorder %s156, %s170
      %p172 = scmp.eq.s32.totalorder %s20, 0
      %p173 = por %p171, %p172
      %s175 = sadd.s32 %s174, 1
      %p178 = scmp.eq.s32.totalorder %s14, 1
      %p179 = scmp.ne.s32.totalorder %s174, %s176
      %p180 = scmp.eq.s32.totalorder %s14, 0
      %p181 = por %p179, %p180
      %p182 = scmp.ne.s32.totalorder %s174, %s176
      %p183 = scmp.eq.s32.totalorder %s19, 1
      %p184 = por %p182, %p183
      %p185 = scmp.ne.s32.totalorder %s176, %s177
      %p186 = scmp.eq.s32.totalorder %s19, 0
      %p187 = por %p185, %p186
      %p188 = scmp.ne.s32.totalorder %s176, %s177
      %p189 = scmp.eq.s32.totalorder %s20, 1
      %p190 = por %p188, %p189
      %p192 = scmp.ne.s32.totalorder %s177, %s191
      %p193 = scmp.eq.s32.totalorder %s20, 0
      %p194 = por %p192, %p193
      %s195 = ssub.s32 %s14, %s21
      %p196 = scmp.eq.s32.totalorder %s195, 0
      %s198 = sadd.s32 %s197, 1
      %s199 = scalar_select %p196, %s197, %s198
      %p202 = pneg %p196
      %p203 = scmp.eq.s32.totalorder %s14, 1
      %p204 = por %p202, %p203
      %p205 = scmp.ne.s32.totalorder %s197, %s200
      %p206 = scmp.eq.s32.totalorder %s14, 0
      %p207 = por %p205, %p206
      %p208 = scmp.ne.s32.totalorder %s197, %s200
      %p209 = scmp.eq.s32.totalorder %s19, 1
      %p210 = por %p208, %p209
      %p211 = scmp.ne.s32.totalorder %s200, %s201
      %p212 = scmp.eq.s32.totalorder %s19, 0
      %p213 = por %p211, %p212
      %p214 = scmp.ne.s32.totalorder %s200, %s201
      %p215 = scmp.eq.s32.totalorder %s20, 1
      %p216 = por %p214, %p215
      %p218 = scmp.ne.s32.totalorder %s201, %s217
      %p219 = scmp.eq.s32.totalorder %s20, 0
      %p220 = por %p218, %p219
      %p221 = scmp.le.s32.totalorder 1, %s14
      %p222 = scmp.lt.s32.totalorder %s14, 3
      %p223 = pnand %p221, %p222
      %p224 = pneg %p223
      // Predicated region
      $region9: #{rfaconv_forward.1} parent=5 // pred_check
        _
      $region10: #{rfaconv_forward.1} parent=5 // pred_check_branch
        %226 = sbr.rel (%p223) target = $region12
      $region11: #{rfaconv_forward.1} parent=5 // pred_region
        %s227 = ssub.s32 %s14, 1
        // Predicated region
        $region13: #{rfaconv_forward.1} parent=11 // pred_check
          %p228 = pneg %p61
        $region14: #{rfaconv_forward.1} parent=11 // pred_check_branch
          %230 = sbr.rel (%p228) target = $region16
        $region15: #{rfaconv_forward.1} parent=11 // pred_region
          _
        $region16: #{rfaconv_forward.1} parent=11 // pred_fallthru
          _
        // Predicated region
        $region17: #{rfaconv_forward.1} parent=11 // pred_check
          %p231 = pneg %p82
        $region18: #{rfaconv_forward.1} parent=11 // pred_check_branch
          %233 = sbr.rel (%p231) target = $region20
        $region19: #{rfaconv_forward.1} parent=11 // pred_region
          _
        $region20: #{rfaconv_forward.1} parent=11 // pred_fallthru
          _
        // Predicated region
        $region21: #{rfaconv_forward.1} parent=11 // pred_check
          %p234 = pneg %p103
        $region22: #{rfaconv_forward.1} parent=11 // pred_check_branch
          %236 = sbr.rel (%p234) target = $region24
        $region23: #{rfaconv_forward.1} parent=11 // pred_region
          _
        $region24: #{rfaconv_forward.1} parent=11 // pred_fallthru
          _
        // Predicated region
        $region25: #{rfaconv_forward.1} parent=11 // pred_check
          %p237 = pneg %p124
        $region26: #{rfaconv_forward.1} parent=11 // pred_check_branch
          %239 = sbr.rel (%p237) target = $region28
        $region27: #{rfaconv_forward.1} parent=11 // pred_region
          _
        $region28: #{rfaconv_forward.1} parent=11 // pred_fallthru
          _
        // Predicated region
        $region29: #{rfaconv_forward.1} parent=11 // pred_check
          %p240 = pneg %p145
        $region30: #{rfaconv_forward.1} parent=11 // pred_check_branch
          %242 = sbr.rel (%p240) target = $region32
        $region31: #{rfaconv_forward.1} parent=11 // pred_region
          _
        $region32: #{rfaconv_forward.1} parent=11 // pred_fallthru
          _
        // Predicated region
        $region33: #{rfaconv_forward.1} parent=11 // pred_check
          %p243 = pneg %p166
        $region34: #{rfaconv_forward.1} parent=11 // pred_check_branch
          %245 = sbr.rel (%p243) target = $region36
        $region35: #{rfaconv_forward.1} parent=11 // pred_region
          _
        $region36: #{rfaconv_forward.1} parent=11 // pred_fallthru
          _
        // Predicated region
        $region37: #{rfaconv_forward.1} parent=11 // pred_check
          %p246 = pneg %p187
        $region38: #{rfaconv_forward.1} parent=11 // pred_check_branch
          %248 = sbr.rel (%p246) target = $region40
        $region39: #{rfaconv_forward.1} parent=11 // pred_region
          _
        $region40: #{rfaconv_forward.1} parent=11 // pred_fallthru
          _
      $region12: #{rfaconv_forward.1} parent=5 // pred_fallthru
        _
      %p249 = scmp.lt.s32.totalorder %s14, 2
      // Predicated region
      $region41: #{rfaconv_forward.1} parent=5 // pred_check
        %p250 = pneg %p249
      $region42: #{rfaconv_forward.1} parent=5 // pred_check_branch
        %252 = sbr.rel (%p250) target = $region44
      $region43: #{rfaconv_forward.1} parent=5 // pred_region
        // Predicated region
        $region45: #{rfaconv_forward.1} parent=43 // pred_check
          %p253 = pneg %p34
        $region46: #{rfaconv_forward.1} parent=43 // pred_check_branch
          %255 = sbr.rel (%p253) target = $region48
        $region47: #{rfaconv_forward.1} parent=43 // pred_region
          %s256 = sand.u32 %s24, 1
          %s257 = sand.u32 %s24, 1
          %s258 = smul.addr %s257, 80
          %s259 = scalar_lea.vmem [#allocation2], %s258
          %s260 = smul.u32 2, %s14
          %s261 = smul.addr %s260, 8
          %s262 = scalar_lea.vmem %s0, %s261
          // Predicated region
          $region49: #{rfaconv_forward.1} parent=47 // pred_check
            _
          $region50: #{rfaconv_forward.1} parent=47 // pred_check_branch
            %264 = sbr.rel (0) target = $region52
          $region51: #{rfaconv_forward.1} parent=47 // pred_region
            // Predicated region
            $region53: #{rfaconv_forward.1} parent=51 // pred_check
              _
            $region54: #{rfaconv_forward.1} parent=51 // pred_check_branch
              %266 = sbr.rel (0) target = $region56
            $region55: #{rfaconv_forward.1} parent=51 // pred_region
              loop: start=0, step=1, limit=1
              $region57: #{rfaconv_forward.1} parent=55 // loop_pre_header
                _
              $region58: #{rfaconv_forward.1} parent=55 // loop_header
                %s268 = sphi 0, %s272
                %p269 = scmp.ge.s32.totalorder %s268, 1
                %s273 = sphi %s262, %s262
                %s274 = sphi %s259, %s259
              $region59: #{rfaconv_forward.1} parent=55 // loop_header_branch
                %271 = sbr.rel (%p269) target = $region63
              $region60: #{rfaconv_forward.1} parent=55 // loop_body
                %v275 = vld [vmem:[%s273] sm:$0xff]
                %276 = vst [vmem:[%s274] sm:$0xff] %v275
                %v277 = vld [vmem:[%s273 + $0x8] sm:$0xff]
                %278 = vst [vmem:[%s274 + $0x8] sm:$0xff] %v277
                %v279 = vld [vmem:[%s273 + $0x20] sm:$0xff]
                %280 = vst [vmem:[%s274 + $0x10] sm:$0xff] %v279
                %v281 = vld [vmem:[%s273 + $0x28] sm:$0xff]
                %282 = vst [vmem:[%s274 + $0x18] sm:$0xff] %v281
                %v283 = vld [vmem:[%s273 + $0x40] sm:$0xff]
                %284 = vst [vmem:[%s274 + $0x20] sm:$0xff] %v283
                %v285 = vld [vmem:[%s273 + $0x48] sm:$0xff]
                %286 = vst [vmem:[%s274 + $0x28] sm:$0xff] %v285
                %v287 = vld [vmem:[%s273 + $0x60] sm:$0xff]
                %288 = vst [vmem:[%s274 + $0x30] sm:$0xff] %v287
                %v289 = vld [vmem:[%s273 + $0x68] sm:$0xff]
                %290 = vst [vmem:[%s274 + $0x38] sm:$0xff] %v289
                %v291 = vld [vmem:[%s273 + $0x80] sm:$0xff]
                %292 = vst [vmem:[%s274 + $0x40] sm:$0xff] %v291
                %v293 = vld [vmem:[%s273 + $0x88] sm:$0xff]
                %294 = vst [vmem:[%s274 + $0x48] sm:$0xff] %v293
              $region61: #{rfaconv_forward.1} parent=55 // loop_footer
                %s272 = sadd.s32 1, %s268
              $region62: #{rfaconv_forward.1} parent=55 // loop_footer_branch
                %267 = sbr.rel target = $region58
              $region63: #{rfaconv_forward.1} parent=55 // loop_exit
                _
            $region56: #{rfaconv_forward.1} parent=51 // pred_fallthru
              _
            // Predicated region
            $region64: #{rfaconv_forward.1} parent=51 // pred_check
              _
            $region65: #{rfaconv_forward.1} parent=51 // pred_check_branch
              %296 = sbr.rel target = $region67
            $region66: #{rfaconv_forward.1} parent=51 // pred_region
              _
            $region67: #{rfaconv_forward.1} parent=51 // pred_fallthru
              _
          $region52: #{rfaconv_forward.1} parent=47 // pred_fallthru
            _
          %297 = vnop
        $region48: #{rfaconv_forward.1} parent=43 // pred_fallthru
          _
      $region44: #{rfaconv_forward.1} parent=5 // pred_fallthru
        _
      %p298 = scmp.le.s32.totalorder 1, %s14
      %p299 = scmp.lt.s32.totalorder %s14, 3
      %p300 = pnand %p298, %p299
      %p301 = pneg %p300
      // Predicated region
      $region68: #{rfaconv_forward.1} parent=5 // pred_check
        _
      $region69: #{rfaconv_forward.1} parent=5 // pred_check_branch
        %303 = sbr.rel (%p300) target = $region71
      $region70: #{rfaconv_forward.1} parent=5 // pred_region
        %s304 = ssub.s32 %s14, 1
        %s305 = sand.u32 %s27, 1
        %s306 = sand.u32 %s27, 1
        %s307 = smul.addr %s306, 80
        %s308 = scalar_lea.vmem [#allocation2], %s307
        // Predicated region
        $region72: #{rfaconv_forward.1} parent=70 // pred_check
          %p309 = pneg %p40
        $region73: #{rfaconv_forward.1} parent=70 // pred_check_branch
          %311 = sbr.rel (%p309) target = $region75
        $region74: #{rfaconv_forward.1} parent=70 // pred_region
          _
        $region75: #{rfaconv_forward.1} parent=70 // pred_fallthru
          _
        %s312 = sand.u32 %s27, 1
        %s313 = sand.u32 %s27, 1
        %s314 = smul.addr %s313, 80
        %s315 = scalar_lea.vmem [#allocation2], %s314
        %p316 = pneg %p40
        %p317 = pneg %p37
        %p318 = pneg %p61
        %p319 = pneg %p58
        %p320 = pneg %p82
        %p321 = pneg %p79
        %p322 = pneg %p103
        %p323 = pneg %p100
        %p324 = pneg %p124
        %p325 = pneg %p121
        %p326 = pneg %p145
        %p327 = pneg %p142
        %p328 = pneg %p166
        %p329 = pneg %p163
        %p330 = pneg %p187
        %p331 = pneg %p184
        %p332 = pneg %p213
        %p333 = pneg %p210
        %s334 = smul.u32 2, %s19
        %p335 = scmp.lt.s32.totalorder %s334, 3
        %s336 = scalar_select %p335, %s334, 3
        %s337 = smul.addr %s336, 8
        %s338 = scalar_lea.vmem %s8, %s337
        %s339 = smul.u32 2, %s19
        %s340 = smul.u32 2, %s19
        %p341 = scmp.lt.s32.totalorder %s340, 3
        %s342 = scalar_select %p341, %s340, 3
        %s343 = smul.addr %s342, 8
        %s344 = scalar_lea.vmem %s8, %s343
        %s345 = smul.u32 2, %s19
        %v346 = vld [vmem:[%s308] sm:$0xff]
        %v347 = vld [vmem:[%s308 + $0x8] sm:$0xff]
        %v348 = vld [vmem:[%s308 + $0x10] sm:$0xff]
        %v349 = vld [vmem:[%s308 + $0x18] sm:$0xff]
        %v350 = vld [vmem:[%s308 + $0x20] sm:$0xff]
        %v351 = vld [vmem:[%s308 + $0x28] sm:$0xff]
        %v352 = vld [vmem:[%s308 + $0x30] sm:$0xff]
        %v353 = vld [vmem:[%s308 + $0x38] sm:$0xff]
        %v354 = vld [vmem:[%s308 + $0x40] sm:$0xf]
        %v355 = vld [vmem:[%s308 + $0x48] sm:$0xf]
        %v356 = vld [vmem:[%s1] sm:$0xff]
        %v357 = vld [vmem:[%s1 + $0x8] sm:$0xff]
        %v358 = vld [vmem:[%s1 + $0x10] sm:$0xff]
        %v359 = vld [vmem:[%s1 + $0x18] sm:$0xff]
        %v360 = vld [vmem:[%s1 + $0x20] sm:$0xf]
        %vm361 = vcmask 293888
        %v363 = vsel %vm361, %v356, 0
        %v366 = vsel %vm361, %v357, 0
        %v369 = vsel %vm361, %v358, 0
        %v372 = vsel %vm361, %v359, 0
        %v375 = vsel %vm361, %v360, 0
        %vm377 = vcmask 1043456
        %v379 = vsel %vm377, %v354, 0
        %v382 = vsel %vm377, %v355, 0
        %384 = vmatpush.msra.mxu0 0.0
        %385 = vmatpush.msra.mxu0 0.0
        %386 = vmatpush.msra.mxu0 0.0
        %387 = vmatpush.msra.mxu0 0.0
        %388 = vmatpush.msra.mxu0 0.0
        %389 = vmatpush.msra.mxu0 0.0
        %390 = vmatpush.msra.mxu0 0.0
        %391 = vmatpush.msra.mxu0 0.0
        %392 = vmatpush.msra.mxu0 0.0
        %393 = vmatpush.msra.mxu0 0.0
        %394 = vmatpush.msra.mxu0 0.0
        %395 = vmatpush.msra.mxu0 %v379
        %396 = vmatpush.msra.mxu0 %v352
        %397 = vmatpush.msra.mxu0 %v350
        %398 = vmatpush.msra.mxu0 %v348
        %399 = vmatpush.msra.mxu0 %v346
        %400 = vmatmul.f32.gmra.mxu0 %v363
        %v401 = vpop.f32.mrf.mxu0
        %v402 = vadd.f32 0.0, %v401
        %403 = vmatmul.f32.gmra.mxu0 %v366
        %v404 = vpop.f32.mrf.mxu0
        %v405 = vadd.f32 0.0, %v404
        %406 = vmatmul.f32.gmra.mxu0 %v369
        %v407 = vpop.f32.mrf.mxu0
        %v408 = vadd.f32 0.0, %v407
        %409 = vmatmul.f32.gmra.mxu0 %v372
        %v410 = vpop.f32.mrf.mxu0
        %v411 = vadd.f32 0.0, %v410
        %412 = vmatmul.f32.gmra.mxu0 %v375
        %v413 = vpop.f32.mrf.mxu0
        %v414 = vadd.f32 0.0, %v413
        %415 = vdwg.mxu0
        %416 = vmatpush.msra.mxu0 0.0
        %417 = vmatpush.msra.mxu0 0.0
        %418 = vmatpush.msra.mxu0 0.0
        %419 = vmatpush.msra.mxu0 0.0
        %420 = vmatpush.msra.mxu0 0.0
        %421 = vmatpush.msra.mxu0 0.0
        %422 = vmatpush.msra.mxu0 0.0
        %423 = vmatpush.msra.mxu0 0.0
        %424 = vmatpush.msra.mxu0 0.0
        %425 = vmatpush.msra.mxu0 0.0
        %426 = vmatpush.msra.mxu0 0.0
        %427 = vmatpush.msra.mxu0 %v382
        %428 = vmatpush.msra.mxu0 %v353
        %429 = vmatpush.msra.mxu0 %v351
        %430 = vmatpush.msra.mxu0 %v349
        %431 = vmatpush.msra.mxu0 %v347
        %432 = vmatmul.f32.gmra.mxu0 %v363
        %v433 = vpop.f32.mrf.mxu0
        %v434 = vadd.f32 0.0, %v433
        %435 = vmatmul.f32.gmra.mxu0 %v366
        %v436 = vpop.f32.mrf.mxu0
        %v437 = vadd.f32 0.0, %v436
        %438 = vmatmul.f32.gmra.mxu0 %v369
        %v439 = vpop.f32.mrf.mxu0
        %v440 = vadd.f32 0.0, %v439
        %441 = vmatmul.f32.gmra.mxu0 %v372
        %v442 = vpop.f32.mrf.mxu0
        %v443 = vadd.f32 0.0, %v442
        %444 = vmatmul.f32.gmra.mxu0 %v375
        %v445 = vpop.f32.mrf.mxu0
        %v446 = vadd.f32 0.0, %v445
        %447 = vdwg.mxu0
        %v448 = vmax.f32 %v402, %v408
        %v449 = vmax.f32 %v405, %v411
        %v450 = vsel %vm377, %v414, -inf
        %v451 = vmax.f32 %v448, %v450
        %v452 = vmax.f32 %v451, %v449
        %v453 = vrot.slane %v452, 4
        %v454 = vmax.f32 %v452, %v453
        %v455 = vrot.slane %v454, 2
        %v456 = vmax.f32 %v454, %v455
        %v457 = vrot.slane %v456, 1
        %v458 = vmax.f32 %v456, %v457
        %v459 = vmax.f32 %v434, %v440
        %v460 = vmax.f32 %v437, %v443
        %v461 = vsel %vm377, %v446, -inf
        %v462 = vmax.f32 %v459, %v461
        %v463 = vmax.f32 %v462, %v460
        %v464 = vrot.slane %v463, 4
        %v465 = vmax.f32 %v463, %v464
        %v466 = vrot.slane %v465, 2
        %v467 = vmax.f32 %v465, %v466
        %v468 = vrot.slane %v467, 1
        %v469 = vmax.f32 %v467, %v468
        %v470 = vsub.f32 %v402, %v458
        %v471 = vsub.f32 %v434, %v469
        %v472 = vsub.f32 %v405, %v458
        %v473 = vsub.f32 %v437, %v469
        %v474 = vsub.f32 %v408, %v458
        %v475 = vsub.f32 %v440, %v469
        %v476 = vsub.f32 %v411, %v458
        %v477 = vsub.f32 %v443, %v469
        %v478 = vsub.f32 %v414, %v458
        %v479 = vsub.f32 %v446, %v469
        %v480 = vmul.f32 %v470, 1.442695
        %v481 = vpow.pop %v480
        %v482 = vmul.f32 %v471, 1.442695
        %v483 = vpow.pop %v482
        %v484 = vmul.f32 %v472, 1.442695
        %v485 = vpow.pop %v484
        %v486 = vmul.f32 %v473, 1.442695
        %v487 = vpow.pop %v486
        %v488 = vmul.f32 %v474, 1.442695
        %v489 = vpow.pop %v488
        %v490 = vmul.f32 %v475, 1.442695
        %v491 = vpow.pop %v490
        %v492 = vmul.f32 %v476, 1.442695
        %v493 = vpow.pop %v492
        %v494 = vmul.f32 %v477, 1.442695
        %v495 = vpow.pop %v494
        %v496 = vmul.f32 %v478, 1.442695
        %v497 = vpow.pop %v496
        %v498 = vmul.f32 %v479, 1.442695
        %v499 = vpow.pop %v498
        %v500 = vld [vmem:[%s2] sm:$0xff]
        %v501 = vld [vmem:[%s2 + $0x8] sm:$0xff]
        %v502 = vld [vmem:[%s2 + $0x10] sm:$0xff]
        %v503 = vld [vmem:[%s2 + $0x18] sm:$0xff]
        %v504 = vld [vmem:[%s2 + $0x20] sm:$0xf]
        %v506 = vsel %vm361, %v500, 0
        %v509 = vsel %vm361, %v501, 0
        %v512 = vsel %vm361, %v502, 0
        %v515 = vsel %vm361, %v503, 0
        %v518 = vsel %vm361, %v504, 0
        %v521 = vsel %vm377, %v497, 0
        %v524 = vsel %vm377, %v499, 0
        %526 = vmatpush.msra.mxu0 0.0
        %527 = vmatpush.msra.mxu0 0.0
        %528 = vmatpush.msra.mxu0 0.0
        %529 = vmatpush.msra.mxu0 0.0
        %530 = vmatpush.msra.mxu0 0.0
        %531 = vmatpush.msra.mxu0 0.0
        %532 = vmatpush.msra.mxu0 0.0
        %533 = vmatpush.msra.mxu0 0.0
        %534 = vmatpush.msra.mxu0 0.0
        %535 = vmatpush.msra.mxu0 0.0
        %536 = vmatpush.msra.mxu0 0.0
        %537 = vmatpush.msra.mxu0 %v521
        %538 = vmatpush.msra.mxu0 %v493
        %539 = vmatpush.msra.mxu0 %v489
        %540 = vmatpush.msra.mxu0 %v485
        %541 = vmatpush.msra.mxu0 %v481
        %542 = vmatmul.f32.gmra.mxu0 %v506
        %v543 = vpop.f32.mrf.mxu0
        %v544 = vadd.f32 0.0, %v543
        %545 = vmatmul.f32.gmra.mxu0 %v509
        %v546 = vpop.f32.mrf.mxu0
        %v547 = vadd.f32 0.0, %v546
        %548 = vmatmul.f32.gmra.mxu0 %v512
        %v549 = vpop.f32.mrf.mxu0
        %v550 = vadd.f32 0.0, %v549
        %551 = vmatmul.f32.gmra.mxu0 %v515
        %v552 = vpop.f32.mrf.mxu0
        %v553 = vadd.f32 0.0, %v552
        %554 = vmatmul.f32.gmra.mxu0 %v518
        %v555 = vpop.f32.mrf.mxu0
        %v556 = vadd.f32 0.0, %v555
        %557 = vdwg.mxu0
        %558 = vmatpush.msra.mxu0 0.0
        %559 = vmatpush.msra.mxu0 0.0
        %560 = vmatpush.msra.mxu0 0.0
        %561 = vmatpush.msra.mxu0 0.0
        %562 = vmatpush.msra.mxu0 0.0
        %563 = vmatpush.msra.mxu0 0.0
        %564 = vmatpush.msra.mxu0 0.0
        %565 = vmatpush.msra.mxu0 0.0
        %566 = vmatpush.msra.mxu0 0.0
        %567 = vmatpush.msra.mxu0 0.0
        %568 = vmatpush.msra.mxu0 0.0
        %569 = vmatpush.msra.mxu0 %v524
        %570 = vmatpush.msra.mxu0 %v495
        %571 = vmatpush.msra.mxu0 %v491
        %572 = vmatpush.msra.mxu0 %v487
        %573 = vmatpush.msra.mxu0 %v483
        %574 = vmatmul.f32.gmra.mxu0 %v506
        %v575 = vpop.f32.mrf.mxu0
        %v576 = vadd.f32 0.0, %v575
        %577 = vmatmul.f32.gmra.mxu0 %v509
        %v578 = vpop.f32.mrf.mxu0
        %v579 = vadd.f32 0.0, %v578
        %580 = vmatmul.f32.gmra.mxu0 %v512
        %v581 = vpop.f32.mrf.mxu0
        %v582 = vadd.f32 0.0, %v581
        %583 = vmatmul.f32.gmra.mxu0 %v515
        %v584 = vpop.f32.mrf.mxu0
        %v585 = vadd.f32 0.0, %v584
        %586 = vmatmul.f32.gmra.mxu0 %v518
        %v587 = vpop.f32.mrf.mxu0
        %v588 = vadd.f32 0.0, %v587
        %589 = vdwg.mxu0
        %v590 = vrcp.pop %v544
        %v591 = vrcp.pop %v576
        %v592 = vrcp.pop %v547
        %v593 = vrcp.pop %v579
        %v594 = vrcp.pop %v550
        %v595 = vrcp.pop %v582
        %v596 = vrcp.pop %v553
        %v597 = vrcp.pop %v585
        %v598 = vrcp.pop %v556
        %v599 = vrcp.pop %v588
        %v600 = vmul.f32 %v481, %v590
        %v601 = vmul.f32 %v483, %v591
        %v602 = vmul.f32 %v485, %v592
        %v603 = vmul.f32 %v487, %v593
        %v604 = vmul.f32 %v489, %v594
        %v605 = vmul.f32 %v491, %v595
        %v606 = vmul.f32 %v493, %v596
        %v607 = vmul.f32 %v495, %v597
        %v608 = vmul.f32 %v497, %v598
        %v609 = vmul.f32 %v499, %v599
        %v610 = vld [vmem:[%s3] sm:$0xff]
        %v611 = vld [vmem:[%s3 + $0x8] sm:$0xff]
        %v612 = vld [vmem:[%s3 + $0x10] sm:$0xff]
        %v613 = vld [vmem:[%s3 + $0x18] sm:$0xff]
        %v614 = vld [vmem:[%s3 + $0x20] sm:$0xf]
        %v616 = vsel %vm361, %v610, 0
        %v619 = vsel %vm361, %v611, 0
        %v622 = vsel %vm361, %v612, 0
        %v625 = vsel %vm361, %v613, 0
        %v628 = vsel %vm361, %v614, 0
        %630 = vmatpush.msra.mxu0 0.0
        %631 = vmatpush.msra.mxu0 0.0
        %632 = vmatpush.msra.mxu0 0.0
        %633 = vmatpush.msra.mxu0 0.0
        %634 = vmatpush.msra.mxu0 0.0
        %635 = vmatpush.msra.mxu0 0.0
        %636 = vmatpush.msra.mxu0 0.0
        %637 = vmatpush.msra.mxu0 0.0
        %638 = vmatpush.msra.mxu0 0.0
        %639 = vmatpush.msra.mxu0 0.0
        %640 = vmatpush.msra.mxu0 0.0
        %641 = vmatpush.msra.mxu0 %v379
        %642 = vmatpush.msra.mxu0 %v352
        %643 = vmatpush.msra.mxu0 %v350
        %644 = vmatpush.msra.mxu0 %v348
        %645 = vmatpush.msra.mxu0 %v346
        %646 = vmatmul.f32.gmra.mxu0 %v616
        %v647 = vpop.f32.mrf.mxu0
        %v648 = vadd.f32 0.0, %v647
        %649 = vmatmul.f32.gmra.mxu0 %v619
        %v650 = vpop.f32.mrf.mxu0
        %v651 = vadd.f32 0.0, %v650
        %652 = vmatmul.f32.gmra.mxu0 %v622
        %v653 = vpop.f32.mrf.mxu0
        %v654 = vadd.f32 0.0, %v653
        %655 = vmatmul.f32.gmra.mxu0 %v625
        %v656 = vpop.f32.mrf.mxu0
        %v657 = vadd.f32 0.0, %v656
        %658 = vmatmul.f32.gmra.mxu0 %v628
        %v659 = vpop.f32.mrf.mxu0
        %v660 = vadd.f32 0.0, %v659
        %661 = vdwg.mxu0
        %662 = vmatpush.msra.mxu0 0.0
        %663 = vmatpush.msra.mxu0 0.0
        %664 = vmatpush.msra.mxu0 0.0
        %665 = vmatpush.msra.mxu0 0.0
        %666 = vmatpush.msra.mxu0 0.0
        %667 = vmatpush.msra.mxu0 0.0
        %668 = vmatpush.msra.mxu0 0.0
        %669 = vmatpush.msra.mxu0 0.0
        %670 = vmatpush.msra.mxu0 0.0
        %671 = vmatpush.msra.mxu0 0.0
        %672 = vmatpush.msra.mxu0 0.0
        %673 = vmatpush.msra.mxu0 %v382
        %674 = vmatpush.msra.mxu0 %v353
        %675 = vmatpush.msra.mxu0 %v351
        %676 = vmatpush.msra.mxu0 %v349
        %677 = vmatpush.msra.mxu0 %v347
        %678 = vmatmul.f32.gmra.mxu0 %v616
        %v679 = vpop.f32.mrf.mxu0
        %v680 = vadd.f32 0.0, %v679
        %681 = vmatmul.f32.gmra.mxu0 %v619
        %v682 = vpop.f32.mrf.mxu0
        %v683 = vadd.f32 0.0, %v682
        %684 = vmatmul.f32.gmra.mxu0 %v622
        %v685 = vpop.f32.mrf.mxu0
        %v686 = vadd.f32 0.0, %v685
        %687 = vmatmul.f32.gmra.mxu0 %v625
        %v688 = vpop.f32.mrf.mxu0
        %v689 = vadd.f32 0.0, %v688
        %690 = vmatmul.f32.gmra.mxu0 %v628
        %v691 = vpop.f32.mrf.mxu0
        %v692 = vadd.f32 0.0, %v691
        %693 = vdwg.mxu0
        %v694 = vld [vmem:[%s4] sm:$0xff]
        %v695 = vld [vmem:[%s4 + $0x8] sm:$0xff]
        %v696 = vld [vmem:[%s4 + $0x10] sm:$0xff]
        %v697 = vld [vmem:[%s4 + $0x18] sm:$0xff]
        %v698 = vld [vmem:[%s4 + $0x20] sm:$0xf]
        %700 = vset.pattern.permute.xlu0 0
        %701 = vperm.xlu0 %700, %v694
        %v702 = vpop.permute.xlu0 %701
        %705 = vset.pattern.permute.xlu0 0
        %706 = vperm.xlu0 %705, %v695
        %v707 = vpop.permute.xlu0 %706
        %710 = vset.pattern.permute.xlu0 0
        %711 = vperm.xlu0 %710, %v696
        %v712 = vpop.permute.xlu0 %711
        %715 = vset.pattern.permute.xlu0 0
        %716 = vperm.xlu0 %715, %v697
        %v717 = vpop.permute.xlu0 %716
        %720 = vset.pattern.permute.xlu0 0
        %721 = vperm.xlu0 %720, %v698
        %v722 = vpop.permute.xlu0 %721
        %v724 = vmul.f32 %v648, %v702
        %v725 = vmul.f32 %v680, %v702
        %v726 = vmul.f32 %v651, %v707
        %v727 = vmul.f32 %v683, %v707
        %v728 = vmul.f32 %v654, %v712
        %v729 = vmul.f32 %v686, %v712
        %v730 = vmul.f32 %v657, %v717
        %v731 = vmul.f32 %v689, %v717
        %v732 = vmul.f32 %v660, %v722
        %v733 = vmul.f32 %v692, %v722
        %v734 = vld [vmem:[%s5] sm:$0xff]
        %v735 = vld [vmem:[%s5 + $0x8] sm:$0xff]
        %v736 = vld [vmem:[%s5 + $0x10] sm:$0xff]
        %v737 = vld [vmem:[%s5 + $0x18] sm:$0xff]
        %v738 = vld [vmem:[%s5 + $0x20] sm:$0xf]
        %740 = vset.pattern.permute.xlu0 0
        %741 = vperm.xlu0 %740, %v734
        %v742 = vpop.permute.xlu0 %741
        %745 = vset.pattern.permute.xlu0 0
        %746 = vperm.xlu0 %745, %v735
        %v747 = vpop.permute.xlu0 %746
        %750 = vset.pattern.permute.xlu0 0
        %751 = vperm.xlu0 %750, %v736
        %v752 = vpop.permute.xlu0 %751
        %755 = vset.pattern.permute.xlu0 0
        %756 = vperm.xlu0 %755, %v737
        %v757 = vpop.permute.xlu0 %756
        %760 = vset.pattern.permute.xlu0 0
        %761 = vperm.xlu0 %760, %v738
        %v762 = vpop.permute.xlu0 %761
        %v764 = vadd.f32 %v724, %v742
        %v765 = vadd.f32 %v725, %v742
        %v766 = vadd.f32 %v726, %v747
        %v767 = vadd.f32 %v727, %v747
        %v768 = vadd.f32 %v728, %v752
        %v769 = vadd.f32 %v729, %v752
        %v770 = vadd.f32 %v730, %v757
        %v771 = vadd.f32 %v731, %v757
        %v772 = vadd.f32 %v732, %v762
        %v773 = vadd.f32 %v733, %v762
        %v774 = vmax.f32 %v764, 0.0
        %v775 = vmax.f32 %v765, 0.0
        %v776 = vmax.f32 %v766, 0.0
        %v777 = vmax.f32 %v767, 0.0
        %v778 = vmax.f32 %v768, 0.0
        %v779 = vmax.f32 %v769, 0.0
        %v780 = vmax.f32 %v770, 0.0
        %v781 = vmax.f32 %v771, 0.0
        %v782 = vmax.f32 %v772, 0.0
        %v783 = vmax.f32 %v773, 0.0
        %v784 = vmul.f32 %v774, %v600
        %v785 = vmul.f32 %v775, %v601
        %v786 = vmul.f32 %v776, %v602
        %v787 = vmul.f32 %v777, %v603
        %v788 = vmul.f32 %v778, %v604
        %v789 = vmul.f32 %v779, %v605
        %v790 = vmul.f32 %v780, %v606
        %v791 = vmul.f32 %v781, %v607
        %v792 = vmul.f32 %v782, %v608
        %v793 = vmul.f32 %v783, %v609
        %v794 = vld [vmem:[%s6] sm:$0xff]
        %v795 = vld [vmem:[%s7] sm:$0xff]
        %797 = vset.pattern.permute.xlu0 0
        %798 = vperm.xlu0 %797, %v795
        %v799 = vpop.permute.xlu0 %798
        %v802 = vsel %vm361, %v794, 0
        %v805 = vsel %vm377, %v792, 0
        %v808 = vsel %vm377, %v793, 0
        %810 = vmatpush.msra.mxu0 0.0
        %811 = vmatpush.msra.mxu0 0.0
        %812 = vmatpush.msra.mxu0 0.0
        %813 = vmatpush.msra.mxu0 0.0
        %814 = vmatpush.msra.mxu0 0.0
        %815 = vmatpush.msra.mxu0 0.0
        %816 = vmatpush.msra.mxu0 0.0
        %817 = vmatpush.msra.mxu0 0.0
        %818 = vmatpush.msra.mxu0 0.0
        %819 = vmatpush.msra.mxu0 0.0
        %820 = vmatpush.msra.mxu0 0.0
        %821 = vmatpush.msra.mxu0 %v805
        %822 = vmatpush.msra.mxu0 %v790
        %823 = vmatpush.msra.mxu0 %v788
        %824 = vmatpush.msra.mxu0 %v786
        %825 = vmatpush.msra.mxu0 %v784
        %826 = vmatmul.f32.gmra.mxu0 %v802
        %v827 = vpop.f32.mrf.mxu0
        %v828 = vadd.f32 %v799, %v827
        %829 = vdwg.mxu0
        %830 = vmatpush.msra.mxu0 0.0
        %831 = vmatpush.msra.mxu0 0.0
        %832 = vmatpush.msra.mxu0 0.0
        %833 = vmatpush.msra.mxu0 0.0
        %834 = vmatpush.msra.mxu0 0.0
        %835 = vmatpush.msra.mxu0 0.0
        %836 = vmatpush.msra.mxu0 0.0
        %837 = vmatpush.msra.mxu0 0.0
        %838 = vmatpush.msra.mxu0 0.0
        %839 = vmatpush.msra.mxu0 0.0
        %840 = vmatpush.msra.mxu0 0.0
        %841 = vmatpush.msra.mxu0 %v808
        %842 = vmatpush.msra.mxu0 %v791
        %843 = vmatpush.msra.mxu0 %v789
        %844 = vmatpush.msra.mxu0 %v787
        %845 = vmatpush.msra.mxu0 %v785
        %846 = vmatmul.f32.gmra.mxu0 %v802
        %v847 = vpop.f32.mrf.mxu0
        %v848 = vadd.f32 %v799, %v847
        %849 = vdwg.mxu0
        %850 = vst [vmem:[%s344] sm:$0xff] %v828
        %851 = vst [vmem:[%s344 + $0x8] sm:$0xff] %v848
        %s852 = smul.u32 2, %s19
        %p853 = scmp.lt.s32.totalorder %s852, 3
        %s854 = scalar_select %p853, %s852, 3
        %s855 = smul.addr %s854, 8
        %s856 = scalar_lea.vmem %s8, %s855
        // Predicated region
        $region76: #{rfaconv_forward.1} parent=70 // pred_check
          %p857 = pneg %p210
        $region77: #{rfaconv_forward.1} parent=70 // pred_check_branch
          %859 = sbr.rel (%p857) target = $region79
        $region78: #{rfaconv_forward.1} parent=70 // pred_region
          %s860 = smul.u32 2, %s19
        $region79: #{rfaconv_forward.1} parent=70 // pred_fallthru
          _
      $region71: #{rfaconv_forward.1} parent=5 // pred_fallthru
        _
      %p861 = scmp.le.s32.totalorder 2, %s14
      // Predicated region
      $region80: #{rfaconv_forward.1} parent=5 // pred_check
        %p862 = pneg %p861
      $region81: #{rfaconv_forward.1} parent=5 // pred_check_branch
        %864 = sbr.rel (%p862) target = $region83
      $region82: #{rfaconv_forward.1} parent=5 // pred_region
        %s865 = ssub.s32 %s14, 2
        // Predicated region
        $region84: #{rfaconv_forward.1} parent=82 // pred_check
          %p866 = pneg %p216
        $region85: #{rfaconv_forward.1} parent=82 // pred_check_branch
          %868 = sbr.rel (%p866) target = $region87
        $region86: #{rfaconv_forward.1} parent=82 // pred_region
          %s869 = smul.u32 2, %s20
          %p870 = scmp.lt.s32.totalorder %s869, 3
          %s871 = scalar_select %p870, %s869, 3
          %s872 = smul.addr %s871, 8
          %s873 = scalar_lea.vmem %s8, %s872
        $region87: #{rfaconv_forward.1} parent=82 // pred_fallthru
          _
      $region83: #{rfaconv_forward.1} parent=5 // pred_fallthru
        _
    $region6: #{rfaconv_forward.1} parent=1 // loop_footer
      %s18 = sadd.s32 1, %s14
    $region7: #{rfaconv_forward.1} parent=1 // loop_footer_branch
      %13 = sbr.rel target = $region3
    $region8: #{rfaconv_forward.1} parent=1 // loop_exit
      _

</llo_original>
